<compile_context>
chip_gen: v7x
topology: tpu7x:2x2x1
jax: 0.10.0
libtpu: 0.0.40
codegen_flags: <defaults>
</compile_context>

<pallas_src>
import functools

import numpy as np
import jax
import jax.numpy as jnp
from jax.experimental import pallas as pl
from jax.experimental.pallas import tpu as pltpu


# ----------------------------- Pallas kernels -----------------------------

def _linear_kernel(x_ref, w_ref, b_ref, o_ref):
    # y = x @ w + b; w is [d_in, d_out] (pre-transposed host-side), bf16 MXU operands,
    # f32 accumulation.
    y = jnp.dot(x_ref[...].astype(jnp.bfloat16), w_ref[...],
                preferred_element_type=jnp.float32) + b_ref[...]
    o_ref[...] = y.astype(o_ref.dtype)


def linear_pallas(x, w, b):
    """y = x @ w + b with w stored [d_in, d_out] (PyTorch nn.Linear semantics on w.T).

    Used only for the tiny tokenizer input projections; whole-array VMEM residency is
    both correct and fastest at these shapes.  A (M,N,K)-tiled grid with an f32
    accumulator scratch would be the production-scale version.
    """
    n = x.shape[0]
    d_out = w.shape[1]
    return pl.pallas_call(
        _linear_kernel,
        out_shape=jax.ShapeDtypeStruct((n, d_out), jnp.float32),
        in_specs=[pl.BlockSpec(memory_space=pltpu.MemorySpace.VMEM)] * 3,
        out_specs=pl.BlockSpec(memory_space=pltpu.MemorySpace.VMEM),
    )(x.astype(jnp.float32),
      w.astype(jnp.bfloat16),
      b.reshape(1, d_out).astype(jnp.float32))


def _layer_norm(x, gamma, beta, eps):
    # f32 statistics (PyTorch LayerNorm, eps=1e-5 by default).
    mu = jnp.mean(x, axis=-1, keepdims=True)
    xc = x - mu
    var = jnp.mean(xc * xc, axis=-1, keepdims=True)
    return xc * jax.lax.rsqrt(var + eps) * gamma + beta


def _encoder_stack_kernel(x_ref, mask_ref,
                          wqkv_ref, bqkv_ref, wout_ref, bout_ref,
                          g1_ref, bln1_ref,
                          w1_ref, bf1_ref, w2_ref, bf2_ref,
                          g2_ref, bln2_ref,
                          o_ref, *, num_heads, eps):
    """Fused post-norm transformer encoder stack.

    grid = (G, L): program_id(0) = graph, program_id(1) = layer.
    The output block index is the same for every layer of a graph, so o_ref stays
    resident in VMEM across the layer axis (accumulator pattern) and is written to
    HBM only once per graph.

    x_ref:    (1, S, H) f32 tokens (consumed only at layer 0)
    mask_ref: (1, 1, S) f32 additive key-padding mask (0 valid / -1e9 pad)
    weights:  (1, d_in, d_out) bf16 slices of the per-layer stacked tensors
    biases / LN params: (1, 1, d) f32 slices
    """
    layer = pl.program_id(1)

    @pl.when(layer == 0)
    def _():
        o_ref[...] = x_ref[...]           # seed the resident token buffer

    x = o_ref[0]                          # (S, H) f32, VMEM-resident across layers
    mask = mask_ref[0]                    # (1, S) f32
    S, H = x.shape
    dh = H // num_heads
    scale = 1.0 / float(np.sqrt(dh))

    # ---- fused QKV projection (single matmul, bf16 operands, f32 accum) ----
    xb = x.astype(jnp.bfloat16)
    qkv = jnp.dot(xb, wqkv_ref[0], preferred_element_type=jnp.float32) + bqkv_ref[0]

    # ---- per-head masked attention (static unroll, num_heads is small) ----
    heads = []
    for h in range(num_heads):
        q = qkv[:, h * dh:(h + 1) * dh].astype(jnp.bfloat16)              # (S, dh)
        k = qkv[:, H + h * dh:H + (h + 1) * dh].astype(jnp.bfloat16)      # (S, dh)
        v = qkv[:, 2 * H + h * dh:2 * H + (h + 1) * dh].astype(jnp.bfloat16)
        # scores = q @ k^T via dot_general contracting last dims (no explicit transpose)
        s = jax.lax.dot_general(q, k, (((1,), (1,)), ((), ())),
                                preferred_element_type=jnp.float32) * scale
        s = s + mask                                  # key-padding mask, (S,S)+(1,S)
        s = s - jnp.max(s, axis=-1, keepdims=True)    # f32 stable softmax
        p = jnp.exp(s)
        denom = jnp.sum(p, axis=-1, keepdims=True)
        o_h = jnp.dot(p.astype(jnp.bfloat16), v, preferred_element_type=jnp.float32)
        # normalize after PV (equivalent); reciprocal goes to the EUP slot
        heads.append(o_h * pl.reciprocal(denom, approx=True))
    attn = jnp.concatenate(heads, axis=-1)            # (S, H) f32

    # ---- output projection + residual + LayerNorm ----
    attn = jnp.dot(attn.astype(jnp.bfloat16), wout_ref[0],
                   preferred_element_type=jnp.float32) + bout_ref[0]
    x1 = _layer_norm(x + attn, g1_ref[0], bln1_ref[0], eps)

    # ---- FFN (ReLU) + residual + LayerNorm ----
    h1 = jnp.dot(x1.astype(jnp.bfloat16), w1_ref[0],
                 preferred_element_type=jnp.float32) + bf1_ref[0]
    h1 = jnp.maximum(h1, 0.0)
    h2 = jnp.dot(h1.astype(jnp.bfloat16), w2_ref[0],
                 preferred_element_type=jnp.float32) + bf2_ref[0]
    x2 = _layer_norm(x1 + h2, g2_ref[0], bln2_ref[0], eps)

    o_ref[0] = x2.astype(o_ref.dtype)


def encoder_stack_pallas(x, add_mask, stacked, num_heads, eps=1e-5):
    """Run the full L-layer encoder in one pallas_call.

    x: (G, S_pad, H) f32; add_mask: (G, 1, S_pad) f32 additive key-padding mask.
    stacked: dict of per-layer-stacked weights (leading dim L).
    """
    g, s_pad, hidden = x.shape
    num_layers = stacked["wqkv"].shape[0]

    def w_spec(arr):
        shape = arr.shape
        return pl.BlockSpec((1,) + shape[1:], lambda i, l: (l, 0, 0))

    kernel = functools.partial(_encoder_stack_kernel, num_heads=num_heads, eps=eps)
    return pl.pallas_call(
        kernel,
        out_shape=jax.ShapeDtypeStruct((g, s_pad, hidden), jnp.float32),
        grid=(g, num_layers),
        in_specs=[
            pl.BlockSpec((1, s_pad, hidden), lambda i, l: (i, 0, 0)),   # tokens
            pl.BlockSpec((1, 1, s_pad), lambda i, l: (i, 0, 0)),        # additive mask
            w_spec(stacked["wqkv"]),   # (L, H, 3H) bf16
            w_spec(stacked["bqkv"]),   # (L, 1, 3H)
            w_spec(stacked["wout"]),   # (L, H, H) bf16
            w_spec(stacked["bout"]),   # (L, 1, H)
            w_spec(stacked["g1"]),     # (L, 1, H)
            w_spec(stacked["b1"]),     # (L, 1, H)
            w_spec(stacked["w1"]),     # (L, H, FFN) bf16
            w_spec(stacked["bf1"]),    # (L, 1, FFN)
            w_spec(stacked["w2"]),     # (L, FFN, H) bf16
            w_spec(stacked["bf2"]),    # (L, 1, H)
            w_spec(stacked["g2"]),     # (L, 1, H)
            w_spec(stacked["b2"]),     # (L, 1, H)
        ],
        out_specs=pl.BlockSpec((1, s_pad, hidden), lambda i, l: (i, 0, 0)),
        compiler_params=pltpu.CompilerParams(
            dimension_semantics=("parallel", "arbitrary")),
    )(x.astype(jnp.float32), add_mask.astype(jnp.float32),
      stacked["wqkv"], stacked["bqkv"], stacked["wout"], stacked["bout"],
      stacked["g1"], stacked["b1"],
      stacked["w1"], stacked["bf1"], stacked["w2"], stacked["bf2"],
      stacked["g2"], stacked["b2"])


def stack_encoder_params(layers):
    """Stack per-layer weights along a leading L axis so a single pallas_call can index
    them by layer via the grid."""
    return {
        "wqkv": jnp.stack([ly["in_proj_w"] for ly in layers]).astype(jnp.bfloat16),
        "bqkv": jnp.stack([ly["in_proj_b"].reshape(1, -1) for ly in layers]),
        "wout": jnp.stack([ly["out_proj_w"] for ly in layers]).astype(jnp.bfloat16),
        "bout": jnp.stack([ly["out_proj_b"].reshape(1, -1) for ly in layers]),
        "g1":   jnp.stack([ly["ln1_g"].reshape(1, -1) for ly in layers]),
        "b1":   jnp.stack([ly["ln1_b"].reshape(1, -1) for ly in layers]),
        "w1":   jnp.stack([ly["lin1_w"] for ly in layers]).astype(jnp.bfloat16),
        "bf1":  jnp.stack([ly["lin1_b"].reshape(1, -1) for ly in layers]),
        "w2":   jnp.stack([ly["lin2_w"] for ly in layers]).astype(jnp.bfloat16),
        "bf2":  jnp.stack([ly["lin2_b"].reshape(1, -1) for ly in layers]),
        "g2":   jnp.stack([ly["ln2_g"].reshape(1, -1) for ly in layers]),
        "b2":   jnp.stack([ly["ln2_b"].reshape(1, -1) for ly in layers]),
    }


# ----------------------------- parameter init -----------------------------

def _xavier(key, shape):
    bound = float(np.sqrt(6.0 / (shape[0] + shape[1])))
    return jax.random.uniform(key, shape, jnp.float32, -bound, bound)


def init_params(key, node_dim, edge_dim, hidden, num_layers, num_heads, d_p, d_e, ffn_dim):
    in_dim = node_dim + 2 * d_p + d_e
    in_edge_dim = edge_dim + 2 * d_p + d_e
    keys = jax.random.split(key, 5 + 6 * num_layers)
    # All linear weights stored pre-transposed as [d_in, d_out] (kernels do x @ w).
    params = {
        "E_V": _xavier(keys[0], (1, d_e)),
        "E_E": _xavier(keys[1], (1, d_e)),
        "w_in_w": _xavier(keys[2], (in_dim, hidden)),
        "w_in_b": jnp.zeros((hidden,), jnp.float32),
        "we_in_w": _xavier(keys[3], (in_edge_dim, hidden)),
        "we_in_b": jnp.zeros((hidden,), jnp.float32),
        "graph_token": _xavier(keys[4], (1, hidden)),
        "layers": [],
    }
    for l in range(num_layers):
        k = keys[5 + 6 * l: 5 + 6 * (l + 1)]
        params["layers"].append({
            "in_proj_w": _xavier(k[0], (hidden, 3 * hidden)),
            "in_proj_b": jnp.zeros((3 * hidden,), jnp.float32),
            "out_proj_w": _xavier(k[1], (hidden, hidden)),
            "out_proj_b": jnp.zeros((hidden,), jnp.float32),
            "ln1_g": jnp.ones((hidden,), jnp.float32),
            "ln1_b": jnp.zeros((hidden,), jnp.float32),
            "lin1_w": _xavier(k[2], (hidden, ffn_dim)),
            "lin1_b": jnp.zeros((ffn_dim,), jnp.float32),
            "lin2_w": _xavier(k[3], (ffn_dim, hidden)),
            "lin2_b": jnp.zeros((hidden,), jnp.float32),
            "ln2_g": jnp.ones((hidden,), jnp.float32),
            "ln2_b": jnp.zeros((hidden,), jnp.float32),
        })
    return params


# ------------------------------ tokenizer glue ------------------------------

def generate_node_identifiers(batch_np, num_graphs, d_p, seed=0):
    """ORF node identifiers: per-graph QR of a random Gaussian, pad/select to d_p."""
    # TODO(synk): QR decomposition has no Pallas equivalent; done host-side with numpy.
    rng = np.random.default_rng(seed)
    p_list = []
    for i in range(num_graphs):
        n = int((batch_np == i).sum())
        g = rng.standard_normal((n, n)).astype(np.float32)
        q, _ = np.linalg.qr(g)
        if n < d_p:
            q = np.pad(q, ((0, 0), (0, d_p - n)))
        elif n > d_p:
            perm = rng.permutation(n)[:d_p]
            q = q[:, perm]
        p_list.append(q.astype(np.float32))
    return jnp.asarray(np.concatenate(p_list, axis=0))


def prepare_tokens(xv_proj, xe_proj, batch_np, edge_index_np, num_graphs,
                   hidden, graph_token, sublane_pad=8):
    """Scatter node/edge/graph tokens into (G, S_pad, H) with ONE device scatter.

    Sequence layout (per graph): [graph_token | node tokens (pad to max_n) |
    edge tokens (pad to max_e)]. S is padded up to a multiple of `sublane_pad`
    for TPU sublane alignment; padded slots are masked and sliced off later.
    """
    node_num = np.bincount(batch_np, minlength=num_graphs)
    edge_batch = batch_np[edge_index_np[0]]
    edge_num = np.bincount(edge_batch, minlength=num_graphs)
    max_n, max_e = int(node_num.max()), int(edge_num.max())
    seq_len = max_n + max_e + 1                       # +1 for the [graph] token
    s_pad = ((seq_len + sublane_pad - 1) // sublane_pad) * sublane_pad

    node_ptr = np.concatenate([[0], np.cumsum(node_num)]).astype(np.int64)
    edge_ptr = np.concatenate([[0], np.cumsum(edge_num)]).astype(np.int64)

    node_g = batch_np.astype(np.int32)
    node_s = (1 + np.arange(batch_np.shape[0]) - node_ptr[node_g]).astype(np.int32)
    edge_g = edge_batch.astype(np.int32)
    edge_s = (1 + max_n + np.arange(edge_batch.shape[0]) - edge_ptr[edge_g]).astype(np.int32)
    gt_g = np.arange(num_graphs, dtype=np.int32)
    gt_s = np.zeros(num_graphs, dtype=np.int32)

    dest_g_np = np.concatenate([gt_g, node_g, edge_g])
    dest_s_np = np.concatenate([gt_s, node_s, edge_s])

    values = jnp.concatenate(
        [jnp.broadcast_to(graph_token, (num_graphs, hidden)), xv_proj, xe_proj], axis=0)
    tokens = jnp.zeros((num_graphs, s_pad, hidden), jnp.float32)
    tokens = tokens.at[jnp.asarray(dest_g_np), jnp.asarray(dest_s_np)].set(values)

    masks = np.zeros((num_graphs, s_pad), dtype=bool)
    masks[dest_g_np, dest_s_np] = True
    return tokens, masks, seq_len, s_pad


# ------------------------------ full forward ------------------------------

def token_gt_forward(params, x, edge_attr, edge_index_np, batch_np, num_graphs,
                     d_p, d_e, hidden, num_heads):
    num_nodes = x.shape[0]
    num_edges = edge_index_np.shape[1]

    # --- tokenizer ---
    p_ids = generate_node_identifiers(batch_np, num_graphs, d_p)
    e_v = jnp.broadcast_to(params["E_V"], (num_nodes, d_e))
    x_v = jnp.concatenate([x, p_ids, p_ids, e_v], axis=1)
    x_v_proj = linear_pallas(x_v, params["w_in_w"], params["w_in_b"])

    p_u = p_ids[edge_index_np[0]]
    p_v = p_ids[edge_index_np[1]]
    e_e = jnp.broadcast_to(params["E_E"], (num_edges, d_e))
    x_e = jnp.concatenate([edge_attr, p_u, p_v, e_e], axis=1)
    x_e_proj = linear_pallas(x_e, params["we_in_w"], params["we_in_b"])

    tokens, masks_np, seq_len, s_pad = prepare_tokens(
        x_v_proj, x_e_proj, batch_np, edge_index_np, num_graphs,
        hidden, params["graph_token"])

    # --- transformer encoder with key-padding mask ---
    # TODO(synk): FlashAttentionTransformerEncoder is not defined in the source;
    # a standard post-norm transformer encoder (MHA + ReLU FFN, eval-mode dropout)
    # is implemented instead.
    add_mask_np = np.where(masks_np, 0.0, -1e9).astype(np.float32)   # (G, S_pad)
    add_mask = jnp.asarray(add_mask_np)[:, None, :]                  # (G, 1, S_pad)

    stacked = stack_encoder_params(params["layers"])
    out = encoder_stack_pallas(tokens, add_mask, stacked, num_heads)

    # Drop internal sublane padding (keep the reference module's seq_len positions).
    return out[:, :seq_len, :].reshape(-1, hidden)


# ----------------------------------- main -----------------------------------

if __name__ == "__main__":
    # small, deterministic synthetic graph batch
    NODE_FEAT, EDGE_FEAT = 8, 8
    HIDDEN, NUM_LAYERS, NUM_HEADS = 32, 2, 4
    D_P, D_E, FFN = 8, 8, 64
    NUM_GRAPHS = 2

    # graph 0: nodes 0..4 (5 nodes, 8 edges); graph 1: nodes 5..11 (7 nodes, 10 edges)
    batch_np = np.array([0] * 5 + [1] * 7, dtype=np.int32)
    edge_index_np = np.array([
        [0, 1, 2, 3, 4, 1, 2, 3,   5, 6, 7, 8, 9, 10, 11, 6, 7, 8],
        [1, 2, 3, 4, 0, 0, 1, 2,   6, 7, 8, 9, 10, 11, 5, 5, 6, 7],
    ], dtype=np.int32)

    key = jax.random.PRNGKey(0)
    k_feat, k_edge, k_param = jax.random.split(key, 3)
    x = jax.random.normal(k_feat, (batch_np.shape[0], NODE_FEAT), jnp.float32)
    edge_attr = jax.random.normal(k_edge, (edge_index_np.shape[1], EDGE_FEAT), jnp.float32)

    params = init_params(k_param, NODE_FEAT, EDGE_FEAT, HIDDEN, NUM_LAYERS,
                         NUM_HEADS, D_P, D_E, FFN)

    out = token_gt_forward(params, x, edge_attr, edge_index_np, batch_np,
                           NUM_GRAPHS, D_P, D_E, HIDDEN, NUM_HEADS)
    out = jax.block_until_ready(out)
    assert out.shape == (NUM_GRAPHS * (1 + 7 + 10), HIDDEN)
    assert bool(jnp.all(jnp.isfinite(out)))
    print("KERNEL_OK")
</pallas_src>

<mosaic_0001>
module attributes {stable_mosaic.version = 11 : i64} {
  func.func @_linear_kernel(%arg0: memref<12x32xf32, #tpu.memory_space<vmem>>, %arg1: memref<32x32xbf16, #tpu.memory_space<vmem>>, %arg2: memref<1x32xf32, #tpu.memory_space<vmem>>, %arg3: memref<12x32xf32, #tpu.memory_space<vmem>>) attributes {dimension_semantics = [], scalar_prefetch = 0 : i64, scratch_operands = 0 : i64, tpu.core_type = #tpu.core_type<tc>} {
    %c0 = arith.constant 0 : index
    %c0_0 = arith.constant 0 : index
    %0 = vector.load %arg0[%c0, %c0_0] : memref<12x32xf32, #tpu.memory_space<vmem>>, vector<12x32xf32>
    %1 = arith.truncf %0 : vector<12x32xf32> to vector<12x32xbf16>
    %c0_1 = arith.constant 0 : index
    %c0_2 = arith.constant 0 : index
    %2 = vector.load %arg1[%c0_1, %c0_2] : memref<32x32xbf16, #tpu.memory_space<vmem>>, vector<32x32xbf16>
    %cst = arith.constant dense<0.000000e+00> : vector<12x32xf32>
    %3 = tpu.matmul %1, %2, %cst {dimension_numbers = #tpu.dot_dimension_numbers<[1], [0], [0], [1], [0, 0, 1, 1], [], []>} : vector<12x32xbf16>, vector<32x32xbf16>, vector<12x32xf32> -> vector<12x32xf32>
    %c0_3 = arith.constant 0 : index
    %c0_4 = arith.constant 0 : index
    %4 = vector.load %arg2[%c0_3, %c0_4] : memref<1x32xf32, #tpu.memory_space<vmem>>, vector<1x32xf32>
    %5 = vector.broadcast %4 : vector<1x32xf32> to vector<12x32xf32>
    %6 = arith.addf %3, %5 : vector<12x32xf32>
    %c0_5 = arith.constant 0 : index
    %c0_6 = arith.constant 0 : index
    %7 = vector.load %arg3[%c0_5, %c0_6] : memref<12x32xf32, #tpu.memory_space<vmem>>, vector<12x32xf32>
    tpu.vector_store %arg3[%c0_5, %c0_6], %6 {strides = array<i32>} : memref<12x32xf32, #tpu.memory_space<vmem>>, vector<12x32xf32>,
    return
  }
}

</mosaic_0001>

<llo_original>
// kernel: tpu_custom_call.1
$region0: #{tpu_custom_call.1}
  #allocation0 [shape = 'u32[]', space=smem, size = 0x4, offset = 0x4, fixed_abs, tag = 'smem constant byte address 0x4 - core index']
  #allocation1 [shape = 'u32[144,128]{1,0:T(1,128)}', space=vmem, size = 0x12000, scoped, tag = 'internal scratch']
  %s0 = inlined_call_operand.hbm [shape: f32[12,32], index: 0, kind: input, shape index: {}]
  %s1 = inlined_call_operand.hbm [shape: bf16[32,32], index: 1, kind: input, shape index: {}]
  %s2 = inlined_call_operand.vmem [shape: f32[1,32], index: 2, kind: input, shape index: {}]
  %s3 = inlined_call_operand.hbm [shape: f32[12,32], index: 3, kind: output, shape index: {}]
  %s4 = sld [smem:[#allocation0]]
  $region30: #{tpu_custom_call.1} parent=0
    _
  %s6 = ssub.s32 1, %s4
  %s7 = scalar_select 0, %s6, %s4
  $region1: #{tpu_custom_call.1} parent=0
    #allocation2 [shape = 'u8[8192]{0}', space=vmem, size = 0x2000, scoped, tag = 'input window, operand 0, single buffered']
    #allocation3 [shape = 's32[1]{0}', space=sflag, size = 0x4, scoped, tag = 'scoped memory for tpu_custom_call.1']
    #allocation4 [shape = 's32[1]{0}', space=sflag, size = 0x4, scoped, tag = 'scoped memory for tpu_custom_call.1']
    #allocation5 [shape = 'u8[8192]{0}', space=vmem, size = 0x2000, scoped, tag = 'input window, operand 1, single buffered']
    #allocation6 [shape = 's32[1]{0}', space=sflag, size = 0x4, scoped, tag = 'scoped memory for tpu_custom_call.1']
    #allocation7 [shape = 'u8[8192]{0}', space=vmem, size = 0x2000, scoped, tag = 'output window, operand 0, single buffered']
    %8 = vsyncpa [#allocation3], 0
    %9 = vsyncpa [#allocation6], 0
    %10 = vsyncpa [#allocation4], 0
    // Predicated region
    $region2: #{tpu_custom_call.1} parent=1 // pred_check
      _
    $region3: #{tpu_custom_call.1} parent=1 // pred_check_branch
      %12 = sbr.rel (0) target = $region5
    $region4: #{tpu_custom_call.1} parent=1 // pred_region
      %s14 = ssub.s32 256, 256
      %15 = vsyncadd [#allocation3], %s14
      %s16 = sshll.u32 [#allocation2], 4
      %s17 = int_to_ptr.vmem [resolvable:$true] %s16
      %22 = dma.hbm_to_vmem [thread:$0]  %s0, 256, %s17, [#allocation3], 128, 128, 8
    $region5: #{tpu_custom_call.1} parent=1 // pred_fallthru
      _
    // Predicated region
    $region6: #{tpu_custom_call.1} parent=1 // pred_check
      _
    $region7: #{tpu_custom_call.1} parent=1 // pred_check_branch
      %24 = sbr.rel (0) target = $region9
    $region8: #{tpu_custom_call.1} parent=1 // pred_region
      %s26 = ssub.s32 256, 256
      %27 = vsyncadd [#allocation6], %s26
      %s28 = sshll.u32 [#allocation5], 4
      %s29 = int_to_ptr.vmem [resolvable:$true] %s28
      %34 = dma.hbm_to_vmem [thread:$0]  %s1, 256, %s29, [#allocation6], 64, 64, 4
    $region9: #{tpu_custom_call.1} parent=1 // pred_fallthru
      _
    // Predicated region
    $region10: #{tpu_custom_call.1} parent=1 // pred_check
      _
    $region11: #{tpu_custom_call.1} parent=1 // pred_check_branch
      %36 = sbr.rel (0) target = $region13
    $region12: #{tpu_custom_call.1} parent=1 // pred_region
      _
    $region13: #{tpu_custom_call.1} parent=1 // pred_fallthru
      _
    // Predicated region
    $region14: #{tpu_custom_call.1} parent=1 // pred_check
      _
    $region15: #{tpu_custom_call.1} parent=1 // pred_check_branch
      %38 = sbr.rel (0) target = $region17
    $region16: #{tpu_custom_call.1} parent=1 // pred_region
      %39 = dma.done [#allocation3], 256
    $region17: #{tpu_custom_call.1} parent=1 // pred_fallthru
      _
    // Predicated region
    $region18: #{tpu_custom_call.1} parent=1 // pred_check
      _
    $region19: #{tpu_custom_call.1} parent=1 // pred_check_branch
      %41 = sbr.rel (0) target = $region21
    $region20: #{tpu_custom_call.1} parent=1 // pred_region
      %42 = dma.done [#allocation6], 256
    $region21: #{tpu_custom_call.1} parent=1 // pred_fallthru
      _
    %v44 = vld [vmem:[#allocation2] sm:$0xff]
    %v45 = vld [vmem:[#allocation2 + $0x8] sm:$0xf]
    %v46 = vpack.c.bf16 %v45, %v44
    %v47 = vld [vmem:[#allocation5] sm:$0xf]
    %v48 = vld [vmem:[#allocation5 + $0x4] sm:$0xf]
    %v49 = vld [vmem:[#allocation5 + $0x8] sm:$0xf]
    %v50 = vld [vmem:[#allocation5 + $0xc] sm:$0xf]
    %v51 = vld [vmem:[%s2] sm:$0x1]
    %v53 = vlaneseq
    %v54 = vshrl.u32 %v53, 7
    %v55 = vsub.s32 0, %v54
    %v56 = vrot.slane %v51, %v55
    %v62 = vunpack.c.l.b16 %v47
    %v63 = vunpack.c.l.b16 %v48
    %v64 = vunpack.c.l.b16 %v49
    %v65 = vunpack.c.l.b16 %v50
    %v66 = vpack.c.b16 %v63, %v62
    %v67 = vpack.c.b16 %v65, %v64
    %vm70 = vcmask 261120
    %v72 = vsel %vm70, %v46, 0
    %74 = vmatprep.subr.bf16.mxu0 0
    %75 = vmatpush1.bf16.msra.mxu0 %v66
    %76 = vmatprep.subr.bf16.mxu0 0
    %77 = vmatpush1.bf16.msra.mxu0 %v67
    %78 = vmatprep.subr.bf16.mxu0 0
    %79 = vmatpush1.bf16.msra.mxu0 0
    %80 = vmatprep.subr.bf16.mxu0 0
    %81 = vmatpush1.bf16.msra.mxu0 0
    %82 = vmatprep.subr.bf16.mxu0 0
    %83 = vmatpush1.bf16.msra.mxu0 0
    %84 = vmatprep.subr.bf16.mxu0 0
    %85 = vmatpush1.bf16.msra.mxu0 0
    %86 = vmatprep.subr.bf16.mxu0 0
    %87 = vmatpush1.bf16.msra.mxu0 0
    %88 = vmatprep.subr.bf16.mxu0 0
    %89 = vmatpush1.bf16.msra.mxu0 0
    %90 = vmatprep.subr.bf16.mxu0 0
    %91 = vmatpush1.bf16.msra.mxu0 0
    %92 = vmatprep.subr.bf16.mxu0 0
    %93 = vmatpush1.bf16.msra.mxu0 0
    %94 = vmatprep.subr.bf16.mxu0 0
    %95 = vmatpush1.bf16.msra.mxu0 0
    %96 = vmatprep.subr.bf16.mxu0 0
    %97 = vmatpush1.bf16.msra.mxu0 0
    %98 = vmatprep.subr.bf16.mxu0 0
    %99 = vmatpush1.bf16.msra.mxu0 0
    %100 = vmatprep.subr.bf16.mxu0 0
    %101 = vmatpush1.bf16.msra.mxu0 0
    %102 = vmatprep.subr.bf16.mxu0 0
    %103 = vmatpush1.bf16.msra.mxu0 0
    %104 = vmatprep.subr.bf16.mxu0 0
    %105 = vmatpush1.bf16.msra.mxu0 0
    %106 = vmatprep.mubr.bf16.mxu0 0
    %107 = vmatmul.mubr.bf16.gmra.mrb[0].mxu0 %v72
    %v108 = vpop.f32.mrb[0].mxu0
    %v109 = vadd.f32 %v56, %v108
    %v110 = vpop.f32.mrb[0].mxu0
    %v111 = vpop.f32.mrb[0].mxu0
    %v112 = vadd.f32 %v56, %v111
    %v113 = vpop.f32.mrb[0].mxu0
    %114 = vdwg.mxu0
    %115 = vst.msk [vmem:[#allocation7] sm:$0xff] %vm70, %v109
    %vm116 = vcmask 257024
    %117 = vst.msk [vmem:[#allocation7 + $0x8] sm:$0xf] %vm116, %v112
    // Predicated region
    $region22: #{tpu_custom_call.1} parent=1 // pred_check
      _
    $region23: #{tpu_custom_call.1} parent=1 // pred_check_branch
      %119 = sbr.rel (0) target = $region25
    $region24: #{tpu_custom_call.1} parent=1 // pred_region
      %s121 = ssub.s32 256, 256
      %122 = vsyncadd [#allocation4], %s121
      %s123 = sshll.u32 [#allocation7], 4
      %s124 = int_to_ptr.vmem [resolvable:$true] %s123
      %129 = dma.vmem_to_hbm [thread:$0]  %s124, 256, %s3, [#allocation4], 128, 128, 8
    $region25: #{tpu_custom_call.1} parent=1 // pred_fallthru
      _
    // Predicated region
    $region26: #{tpu_custom_call.1} parent=1 // pred_check
      _
    $region27: #{tpu_custom_call.1} parent=1 // pred_check_branch
      %131 = sbr.rel (0) target = $region29
    $region28: #{tpu_custom_call.1} parent=1 // pred_region
      %132 = dma.done [#allocation4], 256
    $region29: #{tpu_custom_call.1} parent=1 // pred_fallthru
      _
    %133 = vsyncpa [#allocation3], 1
    %134 = vsyncpa [#allocation6], 1
    %135 = vsyncpa [#allocation4], 1

</llo_original>
